<compile_context>
chip_gen: v6e
topology: v6e:2x2x1
jax: 0.10.0
libtpu: 0.0.40
codegen_flags: <defaults>
</compile_context>

<pallas_src>
import jax
import jax.numpy as jnp
from jax.experimental import pallas as pl
from jax.experimental.pallas import tpu as pltpu

OBS_DIM = 32          # observation width
HIDDEN = 64           # hidden width of both MLP layers
ACT_DIM = 4           # action width; real model logits are 2*ACT_DIM = (mean | log_std)

LANES = 128           # lane width of the packed parameter slab
ONES_LANE = HIDDEN    # hidden lane that carries a constant 1.0 (bias folding)

# Row layout of the packed parameter slab (all block offsets sublane-aligned).
_W1_R0 = 0                    # rows [  0,  32): W1           (real: [:, :HIDDEN])
_B1_R0 = _W1_R0 + OBS_DIM     # row   32       : b1 + ones-lane seed (rows 33..39 zero)
_W2_R0 = _B1_R0 + 8           # rows [ 40, 168): W2 with b2 folded into row 40+64
_W3_R0 = _W2_R0 + LANES       # rows [168, 296): W3 mean half with b3 folded into row 168+64
P_ROWS = _W3_R0 + LANES       # 296 rows total

TILE_B = 512                  # max batch rows per grid step


# --------------------------------------------------------------------------- #
# Kernel: one (tile_b, OBS_DIM) batch tile -> (tile_b, ACT_DIM) action modes. #
# --------------------------------------------------------------------------- #
def _mlp_mode_kernel(x_ref, p_ref, o_ref):
    wdt = p_ref.dtype
    x = x_ref[...].astype(wdt)                                   # (tb, 32)

    # Static, sublane-aligned views into the single parameter slab.
    w1 = p_ref[_W1_R0:_W1_R0 + OBS_DIM, :]                       # (32, 128)
    b1 = p_ref[_B1_R0:_B1_R0 + 1, :]                             # (1, 128) incl. ones-lane seed
    w2 = p_ref[_W2_R0:_W2_R0 + LANES, :]                         # (128, 128), b2 folded in
    w3 = p_ref[_W3_R0:_W3_R0 + LANES, :]                         # (128, 128), b3 folded, mean half

    # Layer 1: bias add also plants 1.0 in lane ONES_LANE (W1 col is zero there).
    h1 = jnp.maximum(
        jnp.dot(x, w1, preferred_element_type=jnp.float32) + b1.astype(jnp.float32),
        0.0)
    # Layers 2/3: biases ride in the ones-lane row of W2 / W3 (pack time).
    h2 = jnp.maximum(
        jnp.dot(h1.astype(wdt), w2, preferred_element_type=jnp.float32), 0.0)
    logits = jnp.dot(h2.astype(wdt), w3, preferred_element_type=jnp.float32)

    # TanhGaussDistribution.mode() = tanh(mean); log_std half was never packed.
    o_ref[...] = jnp.tanh(logits[:, :ACT_DIM]).astype(o_ref.dtype)


def _mlp_mode_call(x, packed_params, tile_b):
    """x: (b_pad, OBS_DIM) f32, b_pad % tile_b == 0 -> (b_pad, ACT_DIM) f32."""
    b_pad = x.shape[0]
    num_tiles = b_pad // tile_b
    p_bytes = P_ROWS * LANES * jnp.dtype(packed_params.dtype).itemsize
    return pl.pallas_call(
        _mlp_mode_kernel,
        out_shape=jax.ShapeDtypeStruct((b_pad, ACT_DIM), jnp.float32),
        grid=(num_tiles,),
        in_specs=[
            # Batch tile; last dim (32) equals the full array dim -> legal block.
            pl.BlockSpec((tile_b, OBS_DIM), lambda i: (i, 0)),
            # Whole parameter slab, grid-invariant (DMA'd once, reused).
            pl.BlockSpec((P_ROWS, LANES), lambda i: (0, 0)),
        ],
        # Narrow lane-exact output; last dim (4) equals the full array dim.
        out_specs=pl.BlockSpec((tile_b, ACT_DIM), lambda i: (i, 0)),
        compiler_params=pltpu.CompilerParams(
            dimension_semantics=("parallel",),      # batch steps split across TCs (v7x)
        ),
        cost_estimate=pl.CostEstimate(
            flops=2 * b_pad * (OBS_DIM * HIDDEN + HIDDEN * HIDDEN + HIDDEN * ACT_DIM),
            transcendentals=b_pad * ACT_DIM,
            bytes_accessed=b_pad * (OBS_DIM + ACT_DIM) * 4 + p_bytes,
        ),
    )(x, packed_params)


# --------------------------------------------------------------------------- #
# Wrappers                                                                    #
# --------------------------------------------------------------------------- #
@jax.jit
def inference_helper_forward_batched(obs_batch, packed_params):
    """Vectorized path: (B, OBS_DIM) f32 -> (B, ACT_DIM) f32 action modes."""
    B = obs_batch.shape[0]
    b_pad = max(8, pl.next_power_of_2(B))     # power-of-two bucket limits recompiles
    tile_b = min(TILE_B, b_pad)
    x = obs_batch.astype(jnp.float32)
    if b_pad != B:
        x = jnp.pad(x, ((0, b_pad - B), (0, 0)))
    out = _mlp_mode_call(x, packed_params, tile_b)
    return out if b_pad == B else out[:B]


@jax.jit
def inference_helper_forward(obs, packed_params):
    """Matches _InferenceHelper.forward: (OBS_DIM,) -> (ACT_DIM,)."""
    x = obs.astype(jnp.float32)[None, :]      # torch: obs.unsqueeze(0)
    out = _mlp_mode_call(x, packed_params, tile_b=1)
    return out[0]                             # torch: mode.squeeze(0)


# --------------------------------------------------------------------------- #
# Parameter construction / packing                                            #
# --------------------------------------------------------------------------- #
def init_params(key):
    """Deterministic synthetic parameters matching the MLP policy shapes."""
    k1, k2, k3, k4, k5, k6 = jax.random.split(key, 6)
    scale = 0.1
    w1 = scale * jax.random.normal(k1, (OBS_DIM, HIDDEN), jnp.float32)
    b1 = scale * jax.random.normal(k2, (1, HIDDEN), jnp.float32)
    w2 = scale * jax.random.normal(k3, (HIDDEN, HIDDEN), jnp.float32)
    b2 = scale * jax.random.normal(k4, (1, HIDDEN), jnp.float32)
    w3 = scale * jax.random.normal(k5, (HIDDEN, 2 * ACT_DIM), jnp.float32)
    b3 = scale * jax.random.normal(k6, (1, 2 * ACT_DIM), jnp.float32)
    return (w1, b1, w2, b2, w3, b3)


def pack_params(w1, b1, w2, b2, w3, b3, dtype=jnp.float32):
    """Pack all layers into one (P_ROWS, 128) slab.

    Layout:
      rows [0:32)   : W1 (lanes [0:64)); lane ONES_LANE column is zero.
      row  32       : b1 (lanes [0:64)) and 1.0 at lane ONES_LANE -> after the
                      layer-1 bias add + ReLU, activation lane ONES_LANE == 1.
      rows [40:168) : W2 (real [0:64,0:64)); row 40+64 = b2 (lanes [0:64)) and
                      1.0 at lane ONES_LANE so the ones-lane propagates.
      rows [168:296): W3 mean half (real [0:64,0:4)); row 168+64 = b3[:4].
    Only the mean half of layer 3 is packed (mode() never uses log_std).
    Zero padding keeps all unused lanes of every activation exactly 0.
    """
    slab = jnp.zeros((P_ROWS, LANES), jnp.float32)
    slab = slab.at[_W1_R0:_W1_R0 + OBS_DIM, 0:HIDDEN].set(jnp.asarray(w1, jnp.float32))
    slab = slab.at[_B1_R0, 0:HIDDEN].set(jnp.asarray(b1, jnp.float32).reshape(-1))
    slab = slab.at[_B1_R0, ONES_LANE].set(1.0)
    slab = slab.at[_W2_R0:_W2_R0 + HIDDEN, 0:HIDDEN].set(jnp.asarray(w2, jnp.float32))
    slab = slab.at[_W2_R0 + ONES_LANE, 0:HIDDEN].set(jnp.asarray(b2, jnp.float32).reshape(-1))
    slab = slab.at[_W2_R0 + ONES_LANE, ONES_LANE].set(1.0)
    slab = slab.at[_W3_R0:_W3_R0 + HIDDEN, 0:ACT_DIM].set(
        jnp.asarray(w3, jnp.float32)[:, :ACT_DIM])
    slab = slab.at[_W3_R0 + ONES_LANE, 0:ACT_DIM].set(
        jnp.asarray(b3, jnp.float32).reshape(-1)[:ACT_DIM])
    return slab.astype(dtype)


# --------------------------------------------------------------------------- #
# Pure-JAX reference                                                          #
# --------------------------------------------------------------------------- #
def _reference_batched(obs_batch, params):
    w1, b1, w2, b2, w3, b3 = params
    hp = jax.lax.Precision.HIGHEST
    h1 = jnp.maximum(jnp.dot(obs_batch, w1, precision=hp) + b1, 0.0)
    h2 = jnp.maximum(jnp.dot(h1, w2, precision=hp) + b2, 0.0)
    logits = jnp.dot(h2, w3, precision=hp) + b3
    mean = logits[:, :ACT_DIM]
    return jnp.tanh(mean)


if __name__ == "__main__":
    key = jax.random.PRNGKey(0)
    pkey, okey = jax.random.split(key)
    params = init_params(pkey)

    B = 16
    obs_batch = jax.random.normal(okey, (B, OBS_DIM), jnp.float32)
    ref = _reference_batched(obs_batch, params)

    # f32 weight slab: tight check.
    packed_f32 = pack_params(*params, dtype=jnp.float32)
    modes = jax.block_until_ready(inference_helper_forward_batched(obs_batch, packed_f32))
    assert modes.shape == (B, ACT_DIM)
    assert jnp.allclose(modes, ref, atol=2e-3, rtol=2e-3)

    # Non-power-of-two batch exercises the pad / slice path.
    modes5 = jax.block_until_ready(inference_helper_forward_batched(obs_batch[:5], packed_f32))
    assert modes5.shape == (5, ACT_DIM)
    assert jnp.allclose(modes5, ref[:5], atol=2e-3, rtol=2e-3)

    # Single-observation path matching the torch module's forward signature.
    mode0 = jax.block_until_ready(inference_helper_forward(obs_batch[0], packed_f32))
    assert mode0.shape == (ACT_DIM,)
    assert jnp.allclose(mode0, ref[0], atol=2e-3, rtol=2e-3)

    # bf16 weight slab (v6e / v7x friendly): loose check against f32 reference.
    packed_bf16 = pack_params(*params, dtype=jnp.bfloat16)
    modes_bf16 = jax.block_until_ready(
        inference_helper_forward_batched(obs_batch, packed_bf16))
    assert modes_bf16.shape == (B, ACT_DIM)
    assert jnp.allclose(modes_bf16, ref, atol=5e-2, rtol=5e-2)

    print("KERNEL_OK")
</pallas_src>

<mosaic_0001>
module attributes {stable_mosaic.version = 11 : i64} {
  func.func @_mlp_mode_kernel(%arg0: i32, %arg1: memref<16x32xf32, #tpu.memory_space<vmem>>, %arg2: memref<296x128xf32, #tpu.memory_space<vmem>>, %arg3: memref<16x4xf32, #tpu.memory_space<vmem>>) attributes {dimension_semantics = [#tpu.dimension_semantics<parallel>], iteration_bounds = array<i64: 1>, scalar_prefetch = 0 : i64, scratch_operands = 0 : i64, tpu.core_type = #tpu.core_type<tc>, window_params = [{transform_indices = @transform_0, window_bounds = array<i64: 16, 32>}, {pipeline_mode = #tpu.pipeline_mode<synchronous>, transform_indices = @transform_1, window_bounds = array<i64: 296, 128>}, {transform_indices = @transform_2, window_bounds = array<i64: 16, 4>}]} {
    %c0 = arith.constant 0 : index
    %c0_0 = arith.constant 0 : index
    %0 = vector.load %arg1[%c0, %c0_0] : memref<16x32xf32, #tpu.memory_space<vmem>>, vector<16x32xf32>
    %c0_1 = arith.constant 0 : index
    %c0_2 = arith.constant 0 : index
    %1 = vector.load %arg2[%c0_1, %c0_2] : memref<296x128xf32, #tpu.memory_space<vmem>>, vector<32x128xf32>
    %c32 = arith.constant 32 : index
    %c0_3 = arith.constant 0 : index
    %2 = vector.load %arg2[%c32, %c0_3] : memref<296x128xf32, #tpu.memory_space<vmem>>, vector<1x128xf32>
    %c40 = arith.constant 40 : index
    %c0_4 = arith.constant 0 : index
    %3 = vector.load %arg2[%c40, %c0_4] : memref<296x128xf32, #tpu.memory_space<vmem>>, vector<128x128xf32>
    %c168 = arith.constant 168 : index
    %c0_5 = arith.constant 0 : index
    %4 = vector.load %arg2[%c168, %c0_5] : memref<296x128xf32, #tpu.memory_space<vmem>>, vector<128x128xf32>
    %cst = arith.constant dense<0.000000e+00> : vector<16x128xf32>
    %5 = tpu.matmul %0, %1, %cst {dimension_numbers = #tpu.dot_dimension_numbers<[1], [0], [0], [1], [0, 0, 1, 1], [], []>} : vector<16x32xf32>, vector<32x128xf32>, vector<16x128xf32> -> vector<16x128xf32>
    %6 = vector.broadcast %2 : vector<1x128xf32> to vector<16x128xf32>
    %7 = arith.addf %5, %6 : vector<16x128xf32>
    %cst_6 = arith.constant 0.000000e+00 : f32
    %8 = vector.broadcast %cst_6 : f32 to vector<16x128xf32>
    %9 = arith.maximumf %7, %8 : vector<16x128xf32>
    %cst_7 = arith.constant dense<0.000000e+00> : vector<16x128xf32>
    %10 = tpu.matmul %9, %3, %cst_7 {dimension_numbers = #tpu.dot_dimension_numbers<[1], [0], [0], [1], [0, 0, 1, 1], [], []>} : vector<16x128xf32>, vector<128x128xf32>, vector<16x128xf32> -> vector<16x128xf32>
    %cst_8 = arith.constant 0.000000e+00 : f32
    %11 = vector.broadcast %cst_8 : f32 to vector<16x128xf32>
    %12 = arith.maximumf %10, %11 : vector<16x128xf32>
    %cst_9 = arith.constant dense<0.000000e+00> : vector<16x128xf32>
    %13 = tpu.matmul %12, %4, %cst_9 {dimension_numbers = #tpu.dot_dimension_numbers<[1], [0], [0], [1], [0, 0, 1, 1], [], []>} : vector<16x128xf32>, vector<128x128xf32>, vector<16x128xf32> -> vector<16x128xf32>
    %14 = vector.extract_strided_slice %13 {offsets = [0, 0], sizes = [16, 4], strides = [1, 1]} : vector<16x128xf32> to vector<16x4xf32>
    %15 = math.tanh %14 : vector<16x4xf32>
    %c0_10 = arith.constant 0 : index
    %c0_11 = arith.constant 0 : index
    %16 = vector.load %arg3[%c0_10, %c0_11] : memref<16x4xf32, #tpu.memory_space<vmem>>, vector<16x4xf32>
    tpu.vector_store %arg3[%c0_10, %c0_11], %15 {strides = array<i32>} : memref<16x4xf32, #tpu.memory_space<vmem>>, vector<16x4xf32>,
    return
  }
  func.func @transform_0(%arg0: i32) -> (i32, i32) {
    %c0_i32 = arith.constant 0 : i32
    %c0_i32_0 = arith.constant 0 : i32
    return %arg0, %c0_i32 : i32, i32
  }
  func.func @transform_1(%arg0: i32) -> (i32, i32) {
    %c0_i32 = arith.constant 0 : i32
    %c0_i32_0 = arith.constant 0 : i32
    %c0_i32_1 = arith.constant 0 : i32
    return %c0_i32, %c0_i32_0 : i32, i32
  }
  func.func @transform_2(%arg0: i32) -> (i32, i32) {
    %c0_i32 = arith.constant 0 : i32
    %c0_i32_0 = arith.constant 0 : i32
    return %arg0, %c0_i32 : i32, i32
  }
}

</mosaic_0001>

<llo_original>
// kernel: inference_helper_forward_batched.1
$region0: #{inference_helper_forward_batched.1}
  #allocation0 [shape = 'u32[]', space=smem, size = 0x4, offset = 0x4, fixed_abs, tag = 'smem constant byte address 0x4 - core index']
  #allocation1 [shape = 'u32[144,128]{1,0:T(1,128)}', space=vmem, size = 0x12000, scoped, tag = 'internal scratch']
  %s0 = inlined_call_operand.hbm [shape: f32[16,32], index: 0, kind: input, shape index: {}]
  %s1 = inlined_call_operand.hbm [shape: f32[296,128], index: 1, kind: input, shape index: {}]
  %s2 = inlined_call_operand.vmem [shape: f32[16,4], index: 2, kind: output, shape index: {}]
  %s3 = sld [smem:[#allocation0]]
  $region26: #{inference_helper_forward_batched.1} parent=0
    _
  %s5 = ssub.s32 1, %s3
  %s6 = scalar_select 0, %s5, %s3
  $region1: #{inference_helper_forward_batched.1} parent=0
    #allocation2 [shape = 'u8[8192]{0}', space=vmem, size = 0x2000, scoped, tag = 'input window, operand 0, single buffered']
    #allocation3 [shape = 's32[1]{0}', space=sflag, size = 0x4, scoped, tag = 'scoped memory for inference_helper_forward_batched.1']
    #allocation4 [shape = 'u8[151552]{0}', space=vmem, size = 0x25000, scoped, tag = 'input window, operand 1, single buffered']
    #allocation5 [shape = 's32[1]{0}', space=sflag, size = 0x4, scoped, tag = 'scoped memory for inference_helper_forward_batched.1']
    %7 = vsyncpa [#allocation3], 0
    %8 = vsyncpa [#allocation5], 0
    // Predicated region
    $region2: #{inference_helper_forward_batched.1} parent=1 // pred_check
      _
    $region3: #{inference_helper_forward_batched.1} parent=1 // pred_check_branch
      %10 = sbr.rel (0) target = $region5
    $region4: #{inference_helper_forward_batched.1} parent=1 // pred_region
      %s12 = ssub.s32 256, 256
      %13 = vsyncadd [#allocation3], %s12
      %s14 = sshll.u32 [#allocation2], 4
      %s15 = int_to_ptr.vmem [resolvable:$true] %s14
      %20 = dma.hbm_to_vmem [thread:$0]  %s0, 256, %s15, [#allocation3], 128, 128, 8
    $region5: #{inference_helper_forward_batched.1} parent=1 // pred_fallthru
      _
    // Predicated region
    $region6: #{inference_helper_forward_batched.1} parent=1 // pred_check
      _
    $region7: #{inference_helper_forward_batched.1} parent=1 // pred_check_branch
      %22 = sbr.rel (0) target = $region9
    $region8: #{inference_helper_forward_batched.1} parent=1 // pred_region
      %s24 = ssub.s32 4736, 4736
      %25 = vsyncadd [#allocation5], %s24
      %s26 = sshll.u32 [#allocation4], 4
      %s27 = int_to_ptr.vmem [resolvable:$true] %s26
      %32 = dma.hbm_to_vmem [thread:$0]  %s1, 4736, %s27, [#allocation5], 128, 128, 8
    $region9: #{inference_helper_forward_batched.1} parent=1 // pred_fallthru
      _
    // Predicated region
    $region10: #{inference_helper_forward_batched.1} parent=1 // pred_check
      _
    $region11: #{inference_helper_forward_batched.1} parent=1 // pred_check_branch
      %34 = sbr.rel (0) target = $region13
    $region12: #{inference_helper_forward_batched.1} parent=1 // pred_region
      %35 = dma.done [#allocation3], 256
    $region13: #{inference_helper_forward_batched.1} parent=1 // pred_fallthru
      _
    // Predicated region
    $region14: #{inference_helper_forward_batched.1} parent=1 // pred_check
      _
    $region15: #{inference_helper_forward_batched.1} parent=1 // pred_check_branch
      %37 = sbr.rel (0) target = $region17
    $region16: #{inference_helper_forward_batched.1} parent=1 // pred_region
      %38 = dma.done [#allocation5], 4736
    $region17: #{inference_helper_forward_batched.1} parent=1 // pred_fallthru
      _
    %v39 = vld [vmem:[#allocation2] sm:$0xff]
    %v40 = vld [vmem:[#allocation2 + $0x8] sm:$0xff]
    %v41 = vld [vmem:[#allocation4] sm:$0xff]
    %v42 = vld [vmem:[#allocation4 + $0x8] sm:$0xff]
    %v43 = vld [vmem:[#allocation4 + $0x10] sm:$0xff]
    %v44 = vld [vmem:[#allocation4 + $0x18] sm:$0xff]
    %v45 = vld [vmem:[#allocation4 + $0x20] sm:$0x1]
    %v46 = vld [vmem:[#allocation4 + $0x28] sm:$0xff]
    %v47 = vld [vmem:[#allocation4 + $0x30] sm:$0xff]
    %v48 = vld [vmem:[#allocation4 + $0x38] sm:$0xff]
    %v49 = vld [vmem:[#allocation4 + $0x40] sm:$0xff]
    %v50 = vld [vmem:[#allocation4 + $0x48] sm:$0xff]
    %v51 = vld [vmem:[#allocation4 + $0x50] sm:$0xff]
    %v52 = vld [vmem:[#allocation4 + $0x58] sm:$0xff]
    %v53 = vld [vmem:[#allocation4 + $0x60] sm:$0xff]
    %v54 = vld [vmem:[#allocation4 + $0x68] sm:$0xff]
    %v55 = vld [vmem:[#allocation4 + $0x70] sm:$0xff]
    %v56 = vld [vmem:[#allocation4 + $0x78] sm:$0xff]
    %v57 = vld [vmem:[#allocation4 + $0x80] sm:$0xff]
    %v58 = vld [vmem:[#allocation4 + $0x88] sm:$0xff]
    %v59 = vld [vmem:[#allocation4 + $0x90] sm:$0xff]
    %v60 = vld [vmem:[#allocation4 + $0x98] sm:$0xff]
    %v61 = vld [vmem:[#allocation4 + $0xa0] sm:$0xff]
    %v62 = vld [vmem:[#allocation4 + $0xa8] sm:$0xff]
    %v63 = vld [vmem:[#allocation4 + $0xb0] sm:$0xff]
    %v64 = vld [vmem:[#allocation4 + $0xb8] sm:$0xff]
    %v65 = vld [vmem:[#allocation4 + $0xc0] sm:$0xff]
    %v66 = vld [vmem:[#allocation4 + $0xc8] sm:$0xff]
    %v67 = vld [vmem:[#allocation4 + $0xd0] sm:$0xff]
    %v68 = vld [vmem:[#allocation4 + $0xd8] sm:$0xff]
    %v69 = vld [vmem:[#allocation4 + $0xe0] sm:$0xff]
    %v70 = vld [vmem:[#allocation4 + $0xe8] sm:$0xff]
    %v71 = vld [vmem:[#allocation4 + $0xf0] sm:$0xff]
    %v72 = vld [vmem:[#allocation4 + $0xf8] sm:$0xff]
    %v73 = vld [vmem:[#allocation4 + $0x100] sm:$0xff]
    %v74 = vld [vmem:[#allocation4 + $0x108] sm:$0xff]
    %v75 = vld [vmem:[#allocation4 + $0x110] sm:$0xff]
    %v76 = vld [vmem:[#allocation4 + $0x118] sm:$0xff]
    %v77 = vld [vmem:[#allocation4 + $0x120] sm:$0xff]
    %v78 = vlaneseq
    %v79 = vshrl.u32 %v78, 7
    %v80 = vsub.s32 0, %v79
    %v81 = vrot.slane %v45, %v80
    %vm82 = vcmask 261120
    %v84 = vsel %vm82, %v39, 0
    %v87 = vsel %vm82, %v40, 0
    %89 = vmatprep.subr.mxu0 0.0
    %90 = vmatpush1.msra.mxu0 0.0
    %91 = vmatprep.subr.mxu0 0.0
    %92 = vmatpush1.msra.mxu0 0.0
    %93 = vmatprep.subr.mxu0 0.0
    %94 = vmatpush1.msra.mxu0 0.0
    %95 = vmatprep.subr.mxu0 0.0
    %96 = vmatpush1.msra.mxu0 0.0
    %97 = vmatprep.subr.mxu0 0.0
    %98 = vmatpush1.msra.mxu0 0.0
    %99 = vmatprep.subr.mxu0 0.0
    %100 = vmatpush1.msra.mxu0 0.0
    %101 = vmatprep.subr.mxu0 0.0
    %102 = vmatpush1.msra.mxu0 0.0
    %103 = vmatprep.subr.mxu0 0.0
    %104 = vmatpush1.msra.mxu0 0.0
    %105 = vmatprep.subr.mxu0 0.0
    %106 = vmatpush1.msra.mxu0 0.0
    %107 = vmatprep.subr.mxu0 0.0
    %108 = vmatpush1.msra.mxu0 0.0
    %109 = vmatprep.subr.mxu0 0.0
    %110 = vmatpush1.msra.mxu0 0.0
    %111 = vmatprep.subr.mxu0 0.0
    %112 = vmatpush1.msra.mxu0 0.0
    %113 = vmatprep.subr.mxu0 0.0
    %114 = vmatpush1.msra.mxu0 %v44
    %115 = vmatprep.subr.mxu0 0.0
    %116 = vmatpush1.msra.mxu0 %v43
    %117 = vmatprep.subr.mxu0 0.0
    %118 = vmatpush1.msra.mxu0 %v42
    %119 = vmatprep.subr.mxu0 0.0
    %120 = vmatpush1.msra.mxu0 %v41
    %121 = vmatprep.subr.mxu0 0.0
    %122 = vmatpush2.msra.mxu0 0.0
    %123 = vmatprep.subr.mxu0 0.0
    %124 = vmatpush2.msra.mxu0 0.0
    %125 = vmatprep.subr.mxu0 0.0
    %126 = vmatpush2.msra.mxu0 0.0
    %127 = vmatprep.subr.mxu0 0.0
    %128 = vmatpush2.msra.mxu0 0.0
    %129 = vmatprep.subr.mxu0 0.0
    %130 = vmatpush2.msra.mxu0 0.0
    %131 = vmatprep.subr.mxu0 0.0
    %132 = vmatpush2.msra.mxu0 0.0
    %133 = vmatprep.subr.mxu0 0.0
    %134 = vmatpush2.msra.mxu0 0.0
    %135 = vmatprep.subr.mxu0 0.0
    %136 = vmatpush2.msra.mxu0 0.0
    %137 = vmatprep.subr.mxu0 0.0
    %138 = vmatpush2.msra.mxu0 0.0
    %139 = vmatprep.subr.mxu0 0.0
    %140 = vmatpush2.msra.mxu0 0.0
    %141 = vmatprep.subr.mxu0 0.0
    %142 = vmatpush2.msra.mxu0 0.0
    %143 = vmatprep.subr.mxu0 0.0
    %144 = vmatpush2.msra.mxu0 0.0
    %145 = vmatprep.subr.mxu0 0.0
    %146 = vmatpush2.msra.mxu0 0.0
    %147 = vmatprep.subr.mxu0 0.0
    %148 = vmatpush2.msra.mxu0 0.0
    %149 = vmatprep.subr.mxu0 0.0
    %150 = vmatpush2.msra.mxu0 0.0
    %151 = vmatprep.subr.mxu0 0.0
    %152 = vmatpush2.msra.mxu0 0.0
    %153 = vmatprep.mubr.f32.mxu0 0.0
    %154 = vmatmul.mubr.f32.gmra.mxu0 %v84
    %v155 = vpop.f32.mrf.mxu0
    %v156 = vadd.f32 %v81, %v155
    %v157 = vpop.f32.mrf.mxu0
    %158 = vmatprep.mubr.f32.mxu0 0.0
    %159 = vmatmul.mubr.f32.gmra.mxu0 %v87
    %v160 = vpop.f32.mrf.mxu0
    %v161 = vadd.f32 %v81, %v160
    %v162 = vpop.f32.mrf.mxu0
    %163 = vdwg.mxu0
    %v164 = vmax.f32 %v156, 0.0
    %v165 = vmax.f32 %v161, 0.0
    %166 = vmatprep.subr.mxu0 0.0
    %167 = vmatpush1.msra.mxu0 %v61
    %168 = vmatprep.subr.mxu0 0.0
    %169 = vmatpush1.msra.mxu0 %v60
    %170 = vmatprep.subr.mxu0 0.0
    %171 = vmatpush1.msra.mxu0 %v59
    %172 = vmatprep.subr.mxu0 0.0
    %173 = vmatpush1.msra.mxu0 %v58
    %174 = vmatprep.subr.mxu0 0.0
    %175 = vmatpush1.msra.mxu0 %v57
    %176 = vmatprep.subr.mxu0 0.0
    %177 = vmatpush1.msra.mxu0 %v56
    %178 = vmatprep.subr.mxu0 0.0
    %179 = vmatpush1.msra.mxu0 %v55
    %180 = vmatprep.subr.mxu0 0.0
    %181 = vmatpush1.msra.mxu0 %v54
    %182 = vmatprep.subr.mxu0 0.0
    %183 = vmatpush1.msra.mxu0 %v53
    %184 = vmatprep.subr.mxu0 0.0
    %185 = vmatpush1.msra.mxu0 %v52
    %186 = vmatprep.subr.mxu0 0.0
    %187 = vmatpush1.msra.mxu0 %v51
    %188 = vmatprep.subr.mxu0 0.0
    %189 = vmatpush1.msra.mxu0 %v50
    %190 = vmatprep.subr.mxu0 0.0
    %191 = vmatpush1.msra.mxu0 %v49
    %192 = vmatprep.subr.mxu0 0.0
    %193 = vmatpush1.msra.mxu0 %v48
    %194 = vmatprep.subr.mxu0 0.0
    %195 = vmatpush1.msra.mxu0 %v47
    %196 = vmatprep.subr.mxu0 0.0
    %197 = vmatpush1.msra.mxu0 %v46
    %198 = vmatprep.subr.mxu0 0.0
    %199 = vmatpush2.msra.mxu0 0.0
    %200 = vmatprep.subr.mxu0 0.0
    %201 = vmatpush2.msra.mxu0 0.0
    %202 = vmatprep.subr.mxu0 0.0
    %203 = vmatpush2.msra.mxu0 0.0
    %204 = vmatprep.subr.mxu0 0.0
    %205 = vmatpush2.msra.mxu0 0.0
    %206 = vmatprep.subr.mxu0 0.0
    %207 = vmatpush2.msra.mxu0 0.0
    %208 = vmatprep.subr.mxu0 0.0
    %209 = vmatpush2.msra.mxu0 0.0
    %210 = vmatprep.subr.mxu0 0.0
    %211 = vmatpush2.msra.mxu0 0.0
    %212 = vmatprep.subr.mxu0 0.0
    %213 = vmatpush2.msra.mxu0 0.0
    %214 = vmatprep.subr.mxu0 0.0
    %215 = vmatpush2.msra.mxu0 0.0
    %216 = vmatprep.subr.mxu0 0.0
    %217 = vmatpush2.msra.mxu0 0.0
    %218 = vmatprep.subr.mxu0 0.0
    %219 = vmatpush2.msra.mxu0 0.0
    %220 = vmatprep.subr.mxu0 0.0
    %221 = vmatpush2.msra.mxu0 0.0
    %222 = vmatprep.subr.mxu0 0.0
    %223 = vmatpush2.msra.mxu0 0.0
    %224 = vmatprep.subr.mxu0 0.0
    %225 = vmatpush2.msra.mxu0 0.0
    %226 = vmatprep.subr.mxu0 0.0
    %227 = vmatpush2.msra.mxu0 0.0
    %228 = vmatprep.subr.mxu0 0.0
    %229 = vmatpush2.msra.mxu0 0.0
    %230 = vmatprep.mubr.f32.mxu0 0.0
    %231 = vmatmul.mubr.f32.gmra.mxu0 %v164
    %v232 = vpop.f32.mrf.mxu0
    %v233 = vadd.f32 0.0, %v232
    %v234 = vpop.f32.mrf.mxu0
    %235 = vmatprep.mubr.f32.mxu0 0.0
    %236 = vmatmul.mubr.f32.gmra.mxu0 %v165
    %v237 = vpop.f32.mrf.mxu0
    %v238 = vadd.f32 0.0, %v237
    %v239 = vpop.f32.mrf.mxu0
    %240 = vdwg.mxu0
    %v241 = vmax.f32 %v233, 0.0
    %v242 = vmax.f32 %v238, 0.0
    %243 = vmatprep.subr.mxu0 0.0
    %244 = vmatpush1.msra.mxu0 %v77
    %245 = vmatprep.subr.mxu0 0.0
    %246 = vmatpush1.msra.mxu0 %v76
    %247 = vmatprep.subr.mxu0 0.0
    %248 = vmatpush1.msra.mxu0 %v75
    %249 = vmatprep.subr.mxu0 0.0
    %250 = vmatpush1.msra.mxu0 %v74
    %251 = vmatprep.subr.mxu0 0.0
    %252 = vmatpush1.msra.mxu0 %v73
    %253 = vmatprep.subr.mxu0 0.0
    %254 = vmatpush1.msra.mxu0 %v72
    %255 = vmatprep.subr.mxu0 0.0
    %256 = vmatpush1.msra.mxu0 %v71
    %257 = vmatprep.subr.mxu0 0.0
    %258 = vmatpush1.msra.mxu0 %v70
    %259 = vmatprep.subr.mxu0 0.0
    %260 = vmatpush1.msra.mxu0 %v69
    %261 = vmatprep.subr.mxu0 0.0
    %262 = vmatpush1.msra.mxu0 %v68
    %263 = vmatprep.subr.mxu0 0.0
    %264 = vmatpush1.msra.mxu0 %v67
    %265 = vmatprep.subr.mxu0 0.0
    %266 = vmatpush1.msra.mxu0 %v66
    %267 = vmatprep.subr.mxu0 0.0
    %268 = vmatpush1.msra.mxu0 %v65
    %269 = vmatprep.subr.mxu0 0.0
    %270 = vmatpush1.msra.mxu0 %v64
    %271 = vmatprep.subr.mxu0 0.0
    %272 = vmatpush1.msra.mxu0 %v63
    %273 = vmatprep.subr.mxu0 0.0
    %274 = vmatpush1.msra.mxu0 %v62
    %275 = vmatprep.subr.mxu0 0.0
    %276 = vmatpush2.msra.mxu0 0.0
    %277 = vmatprep.subr.mxu0 0.0
    %278 = vmatpush2.msra.mxu0 0.0
    %279 = vmatprep.subr.mxu0 0.0
    %280 = vmatpush2.msra.mxu0 0.0
    %281 = vmatprep.subr.mxu0 0.0
    %282 = vmatpush2.msra.mxu0 0.0
    %283 = vmatprep.subr.mxu0 0.0
    %284 = vmatpush2.msra.mxu0 0.0
    %285 = vmatprep.subr.mxu0 0.0
    %286 = vmatpush2.msra.mxu0 0.0
    %287 = vmatprep.subr.mxu0 0.0
    %288 = vmatpush2.msra.mxu0 0.0
    %289 = vmatprep.subr.mxu0 0.0
    %290 = vmatpush2.msra.mxu0 0.0
    %291 = vmatprep.subr.mxu0 0.0
    %292 = vmatpush2.msra.mxu0 0.0
    %293 = vmatprep.subr.mxu0 0.0
    %294 = vmatpush2.msra.mxu0 0.0
    %295 = vmatprep.subr.mxu0 0.0
    %296 = vmatpush2.msra.mxu0 0.0
    %297 = vmatprep.subr.mxu0 0.0
    %298 = vmatpush2.msra.mxu0 0.0
    %299 = vmatprep.subr.mxu0 0.0
    %300 = vmatpush2.msra.mxu0 0.0
    %301 = vmatprep.subr.mxu0 0.0
    %302 = vmatpush2.msra.mxu0 0.0
    %303 = vmatprep.subr.mxu0 0.0
    %304 = vmatpush2.msra.mxu0 0.0
    %305 = vmatprep.subr.mxu0 0.0
    %306 = vmatpush2.msra.mxu0 0.0
    %307 = vmatprep.mubr.f32.mxu0 0.0
    %308 = vmatmul.mubr.f32.gmra.mxu0 %v241
    %v309 = vpop.f32.mrf.mxu0
    %v310 = vadd.f32 0.0, %v309
    %v311 = vpop.f32.mrf.mxu0
    %312 = vmatprep.mubr.f32.mxu0 0.0
    %313 = vmatmul.mubr.f32.gmra.mxu0 %v242
    %v314 = vpop.f32.mrf.mxu0
    %v315 = vadd.f32 0.0, %v314
    %v316 = vpop.f32.mrf.mxu0
    %317 = vdwg.mxu0
    %v318 = vtanh.pop %v310
    %v319 = vtanh.pop %v315
    %vm320 = vcmask 31744
    %321 = vst.msk [vmem:[%s2] sm:$0xff] %vm320, %v318
    %322 = vst.msk [vmem:[%s2 + $0x8] sm:$0xff] %vm320, %v319
    // Predicated region
    $region18: #{inference_helper_forward_batched.1} parent=1 // pred_check
      _
    $region19: #{inference_helper_forward_batched.1} parent=1 // pred_check_branch
      %324 = sbr.rel (0) target = $region21
    $region20: #{inference_helper_forward_batched.1} parent=1 // pred_region
      _
    $region21: #{inference_helper_forward_batched.1} parent=1 // pred_fallthru
      _
    // Predicated region
    $region22: #{inference_helper_forward_batched.1} parent=1 // pred_check
      _
    $region23: #{inference_helper_forward_batched.1} parent=1 // pred_check_branch
      %326 = sbr.rel (0) target = $region25
    $region24: #{inference_helper_forward_batched.1} parent=1 // pred_region
      _
    $region25: #{inference_helper_forward_batched.1} parent=1 // pred_fallthru
      _
    %327 = vsyncpa [#allocation3], 1
    %328 = vsyncpa [#allocation5], 1

</llo_original>
